<compile_context>
chip_gen: v6e
topology: v6e:2x2x1
jax: 0.10.0
libtpu: 0.0.40
codegen_flags: <defaults>
</compile_context>

<pallas_src>
import math
from typing import NamedTuple, Optional

import jax
import jax.numpy as jnp
from jax import lax
from jax.experimental import pallas as pl
from jax.experimental.pallas import tpu as pltpu

_INV_SQRT2 = 1.0 / math.sqrt(2.0)
_TANH_C = math.sqrt(2.0 / math.pi)


def _round_up(x, m):
    return ((x + m - 1) // m) * m


def _vmem_limit_bytes() -> Optional[int]:
    """Generation-aware scoped-VMEM budget with headroom. None -> Mosaic default."""
    try:
        cap = int(pltpu.get_tpu_info().vmem_capacity_bytes)
        if cap > 0:
            # ~54 MiB on v7x (64 MiB phys), ~108 MiB on v5e/v6e (128 MiB phys).
            return int(cap * 0.85)
    except Exception:
        pass
    return None


def _gelu(h, approximate):
    if approximate:
        # tanh-approx: transcendental runs on the otherwise-idle EUP slot.
        return 0.5 * h * (1.0 + jnp.tanh(_TANH_C * (h + 0.044715 * h * h * h)))
    # Exact erf form (matches torch.nn.GELU default); f32 elementwise.
    return 0.5 * h * (1.0 + lax.erf(h * _INV_SQRT2))


# ---------------------------------------------------------------------------
# Kernels
# ---------------------------------------------------------------------------
def _make_fused_kernel(approximate):
    """Single hidden tile: weights fully resident, no accumulator scratch."""
    def kernel(x_ref, w1_ref, b1_ref, w2_ref, b2_ref, o_ref):
        h = jnp.dot(x_ref[...], w1_ref[...], preferred_element_type=jnp.float32)
        h = _gelu(h + b1_ref[...].astype(jnp.float32), approximate)
        y = jnp.dot(h.astype(w2_ref.dtype), w2_ref[...],
                    preferred_element_type=jnp.float32)
        o_ref[...] = (y + b2_ref[...].astype(jnp.float32)).astype(o_ref.dtype)
    return kernel


def _make_tiled_kernel(approximate):
    """Hidden axis tiled (reduction grid axis, f32 VMEM accumulator)."""
    def kernel(x_ref, w1_ref, b1_ref, w2_ref, b2_ref, o_ref, acc_ref):
        h_idx = pl.program_id(1)

        @pl.when(h_idx == 0)
        def _():
            # Seed accumulator with the fc2 bias: the init store costs the same
            # as writing zeros but removes the epilogue bias-add pass.
            acc_ref[...] = jnp.broadcast_to(
                b2_ref[...].astype(jnp.float32), acc_ref.shape)

        h = jnp.dot(x_ref[...], w1_ref[...], preferred_element_type=jnp.float32)
        h = _gelu(h + b1_ref[...].astype(jnp.float32), approximate)
        acc_ref[...] += jnp.dot(h.astype(w2_ref.dtype), w2_ref[...],
                                preferred_element_type=jnp.float32)

        @pl.when(h_idx == pl.num_programs(1) - 1)
        def _():
            o_ref[...] = acc_ref[...].astype(o_ref.dtype)
    return kernel


# ---------------------------------------------------------------------------
# Parameter preparation (done ONCE, hoisted out of the forward pass)
# ---------------------------------------------------------------------------
class MlpParams(NamedTuple):
    w1: jax.Array        # (d_in, hidden_p)
    b1: jax.Array        # (1, hidden_p)
    w2: jax.Array        # (hidden_p, d_out_p)
    b2: jax.Array        # (1, d_out_p)
    d_out: int           # unpadded output feature count
    hidden_tile: int     # th (== hidden_p when weights are kept resident)


def prepare_mlp_params(w1, b1, w2, b2, *, hidden_tile=None, max_tile_h=512):
    """Pad weights once (lane-dense d_out; hidden to a tile multiple if tiled)."""
    d_in, hidden = w1.shape
    d_out = w2.shape[1]
    d_out_p = _round_up(d_out, 128)
    wsize = jnp.dtype(w1.dtype).itemsize
    budget = _vmem_limit_bytes() or (32 * 1024 * 1024)

    if hidden_tile is None:
        weight_bytes = (d_in * hidden + hidden * d_out_p
                        + hidden + d_out_p) * wsize
        # Keep all weights VMEM-resident when they fit in ~half the budget
        # (the rest is for double-buffered x/out tiles + Mosaic scratch).
        th = hidden if weight_bytes <= budget // 2 else max_tile_h
    else:
        th = hidden_tile

    if th >= hidden:
        th = hidden
        hidden_p = hidden
    else:
        th = max(128, (th // 128) * 128)
        if th >= 256:                       # v6e MXU cadence: 256-multiples for K
            th = (th // 256) * 256
        hidden_p = _round_up(hidden, th)

    if hidden_p != hidden:
        w1 = jnp.pad(w1, ((0, 0), (0, hidden_p - hidden)))
        b1 = jnp.pad(b1, ((0, hidden_p - hidden),))
        w2 = jnp.pad(w2, ((0, hidden_p - hidden), (0, 0)))
    if d_out_p != d_out:
        w2 = jnp.pad(w2, ((0, 0), (0, d_out_p - d_out)))
        b2 = jnp.pad(b2, ((0, d_out_p - d_out),))

    return MlpParams(w1=w1, b1=b1.reshape(1, hidden_p), w2=w2,
                     b2=b2.reshape(1, d_out_p), d_out=d_out, hidden_tile=th)


def _pick_tile_rows(rows, tile_rows, d_in, hidden_p, d_out_p, th, n_h,
                    x_dsize, w_dsize, budget):
    tm = 512 if tile_rows is None else tile_rows
    tm = min(tm, _round_up(rows, 8))
    tm = max(8, (tm // 8) * 8)
    # v7x has 2 TensorCores: keep >= 2 row tiles when rows allow it.
    if rows > 8 and pl.cdiv(rows, tm) < 2:
        tm = max(8, _round_up(pl.cdiv(rows, 2), 8))
    # v6e MXU cadence: 256-multiples once the tile is large.
    if tm >= 256:
        tm = (tm // 256) * 256

    def _need(t):
        if n_h == 1:  # resident weights
            w_bytes = (d_in * hidden_p + hidden_p
                       + hidden_p * d_out_p + d_out_p) * w_dsize
            acc = 0
        else:         # streamed, double-buffered weight slices
            w_bytes = 2 * (d_in * th + th + th * d_out_p + d_out_p) * w_dsize
            acc = t * d_out_p * 4
        return (w_bytes + 2 * t * d_in * x_dsize
                + 2 * t * d_out_p * x_dsize + acc)

    while tm > 8 and _need(tm) > budget:
        tm = max(8, ((tm // 2) // 8) * 8)
    return tm


# ---------------------------------------------------------------------------
# Forward pass
# ---------------------------------------------------------------------------
def mlp_forward(x, params: MlpParams, *, tile_rows=None,
                approximate_gelu=False, interpret=False):
    w1, b1, w2, b2 = params.w1, params.b1, params.w2, params.b2
    d_in, hidden_p = w1.shape
    d_out_p = w2.shape[1]
    th = params.hidden_tile
    n_h = hidden_p // th

    orig_shape = x.shape
    assert orig_shape[-1] == d_in
    x2 = x.reshape(-1, d_in)          # no row padding: ragged last tile via grid
    rows = x2.shape[0]

    vmem_limit = _vmem_limit_bytes()
    budget = vmem_limit or (32 * 1024 * 1024)
    tm = _pick_tile_rows(rows, tile_rows, d_in, hidden_p, d_out_p, th, n_h,
                         jnp.dtype(x.dtype).itemsize,
                         jnp.dtype(w1.dtype).itemsize, budget)

    if n_h == 1:
        # Fast path: weights resident (constant block index -> DMA'd once).
        grid = (pl.cdiv(rows, tm),)
        in_specs = [
            pl.BlockSpec((tm, d_in), lambda i: (i, 0)),
            pl.BlockSpec((d_in, hidden_p), lambda i: (0, 0)),
            pl.BlockSpec((1, hidden_p), lambda i: (0, 0)),
            pl.BlockSpec((hidden_p, d_out_p), lambda i: (0, 0)),
            pl.BlockSpec((1, d_out_p), lambda i: (0, 0)),
        ]
        out_spec = pl.BlockSpec((tm, d_out_p), lambda i: (i, 0))
        scratch = ()
        kernel = _make_fused_kernel(approximate_gelu)
        semantics = ("parallel",)
    else:
        # Hidden axis tiled: reduction axis last, f32 accumulator in VMEM.
        grid = (pl.cdiv(rows, tm), n_h)
        in_specs = [
            pl.BlockSpec((tm, d_in), lambda i, h: (i, 0)),    # resident over h
            pl.BlockSpec((d_in, th), lambda i, h: (0, h)),
            pl.BlockSpec((1, th), lambda i, h: (0, h)),
            # If profiling shows exposed DMA on this (largest) streamed block,
            # add pipeline_mode=pl.Buffered(3) and re-check the VMEM budget.
            pl.BlockSpec((th, d_out_p), lambda i, h: (h, 0)),
            pl.BlockSpec((1, d_out_p), lambda i, h: (0, 0)),
        ]
        out_spec = pl.BlockSpec((tm, d_out_p), lambda i, h: (i, 0))
        scratch = (pltpu.VMEM((tm, d_out_p), jnp.float32),)
        kernel = _make_tiled_kernel(approximate_gelu)
        semantics = ("parallel", "arbitrary")

    out = pl.pallas_call(
        kernel,
        out_shape=jax.ShapeDtypeStruct((rows, d_out_p), x.dtype),
        grid_spec=pltpu.PrefetchScalarGridSpec(
            num_scalar_prefetch=0,
            grid=grid,
            in_specs=in_specs,
            out_specs=out_spec,
            scratch_shapes=scratch,
        ),
        compiler_params=pltpu.CompilerParams(
            dimension_semantics=semantics,
            vmem_limit_bytes=vmem_limit,
        ),
        interpret=interpret,
    )(x2, w1, b1, w2, b2)

    if d_out_p != params.d_out:
        out = out[:, :params.d_out]
    return out.reshape(orig_shape[:-1] + (params.d_out,))


def mlp_pallas(x, w1, b1, w2, b2, *, tile_rows=None, hidden_tile=None,
               approximate_gelu=False, interpret=False):
    """Convenience one-shot API (prefer prepare_mlp_params + mlp_forward when
    the same weights are applied repeatedly)."""
    params = prepare_mlp_params(w1, b1, w2, b2, hidden_tile=hidden_tile)
    return mlp_forward(x, params, tile_rows=tile_rows,
                       approximate_gelu=approximate_gelu, interpret=interpret)


# ---------------------------------------------------------------------------
# Reference + tests
# ---------------------------------------------------------------------------
def _ref_mlp(x, w1, b1, w2, b2):
    h = jnp.dot(x, w1) + b1
    h = 0.5 * h * (1.0 + lax.erf(h / jnp.sqrt(2.0)))
    return jnp.dot(h, w2) + b2
    # TODO(synk): Dropout(p=0.0) is the identity; nonzero-p training dropout is
    # not implemented (PRNG masking would use pltpu.prng_seed/prng_random_bits).


def _make_params(key, d_in, hidden, d_out):
    k1, k2, k3, k4 = jax.random.split(key, 4)
    bound1 = 1.0 / math.sqrt(d_in)
    bound2 = 1.0 / math.sqrt(hidden)
    w1 = jax.random.uniform(k1, (d_in, hidden), jnp.float32, -bound1, bound1)
    b1 = jax.random.uniform(k2, (hidden,), jnp.float32, -bound1, bound1)
    w2 = jax.random.uniform(k3, (hidden, d_out), jnp.float32, -bound2, bound2)
    b2 = jax.random.uniform(k4, (d_out,), jnp.float32, -bound2, bound2)
    return w1, b1, w2, b2


if __name__ == "__main__":
    key = jax.random.PRNGKey(0)

    # --- Case 1: shapes implied by the module's forward (channel-last Linear).
    #     Exercises the resident-weight fast path (single hidden tile).
    B, T, N, D_in = 2, 8, 16, 32
    hidden, D_out = 64, 32
    kx, kp, key = jax.random.split(key, 3)
    x = jax.random.normal(kx, (B, T, N, D_in), dtype=jnp.float32)
    w1, b1, w2, b2 = _make_params(kp, D_in, hidden, D_out)

    params = prepare_mlp_params(w1, b1, w2, b2)      # padding done once
    y = jax.block_until_ready(mlp_forward(x, params))
    y_ref = _ref_mlp(x, w1, b1, w2, b2)
    assert y.shape == (B, T, N, D_out), y.shape
    assert jnp.allclose(y, y_ref, atol=2e-4, rtol=2e-4), \
        float(jnp.max(jnp.abs(y - y_ref)))

    # --- Case 2: force hidden tiling -> accumulator path + ragged last row tile.
    B2, T2, N2, D_in2 = 2, 4, 10, 32
    hidden2, D_out2 = 192, 48
    kx2, kp2, key = jax.random.split(key, 3)
    x2 = jax.random.normal(kx2, (B2, T2, N2, D_in2), dtype=jnp.float32)
    w1b, b1b, w2b, b2b = _make_params(kp2, D_in2, hidden2, D_out2)

    y2 = jax.block_until_ready(
        mlp_pallas(x2, w1b, b1b, w2b, b2b, tile_rows=48, hidden_tile=128))
    y2_ref = _ref_mlp(x2, w1b, b1b, w2b, b2b)
    assert y2.shape == (B2, T2, N2, D_out2), y2.shape
    assert jnp.allclose(y2, y2_ref, atol=2e-4, rtol=2e-4), \
        float(jnp.max(jnp.abs(y2 - y2_ref)))

    print("KERNEL_OK")
</pallas_src>

<mosaic_0001>
module attributes {stable_mosaic.version = 11 : i64} {
  func.func @kernel(%arg0: i32, %arg1: memref<128x32xf32, #tpu.memory_space<vmem>>, %arg2: memref<32x64xf32, #tpu.memory_space<vmem>>, %arg3: memref<1x64xf32, #tpu.memory_space<vmem>>, %arg4: memref<64x128xf32, #tpu.memory_space<vmem>>, %arg5: memref<1x128xf32, #tpu.memory_space<vmem>>, %arg6: memref<128x128xf32, #tpu.memory_space<vmem>>) attributes {dimension_semantics = [#tpu.dimension_semantics<parallel>], iteration_bounds = array<i64: 2>, scalar_prefetch = 0 : i64, scratch_operands = 0 : i64, tpu.core_type = #tpu.core_type<tc>, window_params = [{transform_indices = @transform_0, window_bounds = array<i64: 128, 32>}, {pipeline_mode = #tpu.pipeline_mode<synchronous>, transform_indices = @transform_1, window_bounds = array<i64: 32, 64>}, {pipeline_mode = #tpu.pipeline_mode<synchronous>, transform_indices = @transform_2, window_bounds = array<i64: 1, 64>}, {pipeline_mode = #tpu.pipeline_mode<synchronous>, transform_indices = @transform_3, window_bounds = array<i64: 64, 128>}, {pipeline_mode = #tpu.pipeline_mode<synchronous>, transform_indices = @transform_4, window_bounds = array<i64: 1, 128>}, {transform_indices = @transform_5, window_bounds = array<i64: 128, 128>}]} {
    %c0 = arith.constant 0 : index
    %c0_0 = arith.constant 0 : index
    %0 = vector.load %arg1[%c0, %c0_0] : memref<128x32xf32, #tpu.memory_space<vmem>>, vector<128x32xf32>
    %c0_1 = arith.constant 0 : index
    %c0_2 = arith.constant 0 : index
    %1 = vector.load %arg2[%c0_1, %c0_2] : memref<32x64xf32, #tpu.memory_space<vmem>>, vector<32x64xf32>
    %cst = arith.constant dense<0.000000e+00> : vector<128x64xf32>
    %2 = tpu.matmul %0, %1, %cst {dimension_numbers = #tpu.dot_dimension_numbers<[1], [0], [0], [1], [0, 0, 1, 1], [], []>} : vector<128x32xf32>, vector<32x64xf32>, vector<128x64xf32> -> vector<128x64xf32>
    %c0_3 = arith.constant 0 : index
    %c0_4 = arith.constant 0 : index
    %3 = vector.load %arg3[%c0_3, %c0_4] : memref<1x64xf32, #tpu.memory_space<vmem>>, vector<1x64xf32>
    %4 = vector.broadcast %3 : vector<1x64xf32> to vector<128x64xf32>
    %5 = arith.addf %2, %4 : vector<128x64xf32>
    %cst_5 = arith.constant 5.000000e-01 : f32
    %6 = vector.broadcast %cst_5 : f32 to vector<128x64xf32>
    %7 = arith.mulf %6, %5 : vector<128x64xf32>
    %cst_6 = arith.constant 0.707106769 : f32
    %8 = vector.broadcast %cst_6 : f32 to vector<128x64xf32>
    %9 = arith.mulf %5, %8 : vector<128x64xf32>
    %10 = math.erf %9 : vector<128x64xf32>
    %cst_7 = arith.constant 1.000000e+00 : f32
    %11 = vector.broadcast %cst_7 : f32 to vector<128x64xf32>
    %12 = arith.addf %11, %10 : vector<128x64xf32>
    %13 = arith.mulf %7, %12 : vector<128x64xf32>
    %c0_8 = arith.constant 0 : index
    %c0_9 = arith.constant 0 : index
    %14 = vector.load %arg4[%c0_8, %c0_9] : memref<64x128xf32, #tpu.memory_space<vmem>>, vector<64x128xf32>
    %cst_10 = arith.constant dense<0.000000e+00> : vector<128x128xf32>
    %15 = tpu.matmul %13, %14, %cst_10 {dimension_numbers = #tpu.dot_dimension_numbers<[1], [0], [0], [1], [0, 0, 1, 1], [], []>} : vector<128x64xf32>, vector<64x128xf32>, vector<128x128xf32> -> vector<128x128xf32>
    %c0_11 = arith.constant 0 : index
    %c0_12 = arith.constant 0 : index
    %16 = vector.load %arg5[%c0_11, %c0_12] : memref<1x128xf32, #tpu.memory_space<vmem>>, vector<1x128xf32>
    %17 = vector.broadcast %16 : vector<1x128xf32> to vector<128x128xf32>
    %18 = arith.addf %15, %17 : vector<128x128xf32>
    %c0_13 = arith.constant 0 : index
    %c0_14 = arith.constant 0 : index
    %19 = vector.load %arg6[%c0_13, %c0_14] : memref<128x128xf32, #tpu.memory_space<vmem>>, vector<128x128xf32>
    tpu.vector_store %arg6[%c0_13, %c0_14], %18 {strides = array<i32>} : memref<128x128xf32, #tpu.memory_space<vmem>>, vector<128x128xf32>,
    return
  }
  func.func @transform_0(%arg0: i32) -> (i32, i32) {
    %c0_i32 = arith.constant 0 : i32
    %c0_i32_0 = arith.constant 0 : i32
    return %arg0, %c0_i32 : i32, i32
  }
  func.func @transform_1(%arg0: i32) -> (i32, i32) {
    %c0_i32 = arith.constant 0 : i32
    %c0_i32_0 = arith.constant 0 : i32
    %c0_i32_1 = arith.constant 0 : i32
    return %c0_i32, %c0_i32_0 : i32, i32
  }
  func.func @transform_2(%arg0: i32) -> (i32, i32) {
    %c0_i32 = arith.constant 0 : i32
    %c0_i32_0 = arith.constant 0 : i32
    %c0_i32_1 = arith.constant 0 : i32
    return %c0_i32, %c0_i32_0 : i32, i32
  }
  func.func @transform_3(%arg0: i32) -> (i32, i32) {
    %c0_i32 = arith.constant 0 : i32
    %c0_i32_0 = arith.constant 0 : i32
    %c0_i32_1 = arith.constant 0 : i32
    return %c0_i32, %c0_i32_0 : i32, i32
  }
  func.func @transform_4(%arg0: i32) -> (i32, i32) {
    %c0_i32 = arith.constant 0 : i32
    %c0_i32_0 = arith.constant 0 : i32
    %c0_i32_1 = arith.constant 0 : i32
    return %c0_i32, %c0_i32_0 : i32, i32
  }
  func.func @transform_5(%arg0: i32) -> (i32, i32) {
    %c0_i32 = arith.constant 0 : i32
    %c0_i32_0 = arith.constant 0 : i32
    return %arg0, %c0_i32 : i32, i32
  }
}

</mosaic_0001>

<llo_original>
// kernel: tpu_custom_call.1
$region0: #{tpu_custom_call.1}
  #allocation0 [shape = 'u32[]', space=smem, size = 0x4, offset = 0x4, fixed_abs, tag = 'smem constant byte address 0x4 - core index']
  #allocation1 [shape = 'u32[144,128]{1,0:T(1,128)}', space=vmem, size = 0x12000, scoped, tag = 'internal scratch']
  %s0 = inlined_call_operand.vmem [shape: f32[256,32], index: 0, kind: input, shape index: {}]
  %s1 = inlined_call_operand.vmem [shape: f32[32,64], index: 1, kind: input, shape index: {}]
  %s2 = inlined_call_operand.vmem [shape: f32[1,64], index: 2, kind: input, shape index: {}]
  %s3 = inlined_call_operand.vmem [shape: f32[64,128], index: 3, kind: input, shape index: {}]
  %s4 = inlined_call_operand.vmem [shape: f32[1,128], index: 4, kind: input, shape index: {}]
  %s5 = inlined_call_operand.hbm [shape: f32[256,128], index: 5, kind: output, shape index: {}]
  %s6 = sld [smem:[#allocation0]]
  $region53: #{tpu_custom_call.1} parent=0
    _
  %s8 = ssub.s32 1, %s6
  %s9 = scalar_select 0, %s8, %s6
  $region1: #{tpu_custom_call.1} parent=0
    #allocation2 [shape = 'u8[131072]{0}', space=vmem, size = 0x20000, scoped, tag = 'output window, operand 0']
    #allocation3 [shape = 's32[2]{0}', space=sflag, size = 0x8, scoped, tag = 'scoped memory for tpu_custom_call.1']
    %10 = vsyncpa [#allocation3], 0
    %s11 = scalar_lea.sflag [#allocation3], 1
    %12 = vsyncpa %s11, 0
    loop: start=0, step=1, limit=4
    $region2: #{tpu_custom_call.1} parent=1 // loop_pre_header
      _
    $region3: #{tpu_custom_call.1} parent=1 // loop_header
      %s14 = sphi 0, %s18
      %p15 = scmp.ge.s32.totalorder %s14, 4
      %s24 = sphi 0, %s26
      %s27 = sphi 0, %s24
      %s28 = sphi 0, %s27
      %s44 = sphi 0, %s28
      %s48 = sphi 0, %s48
      %s50 = sphi 0, %s48
      %s51 = sphi 0, %s50
      %s65 = sphi 0, %s51
      %s69 = sphi 0, %s69
      %s71 = sphi 0, %s69
      %s72 = sphi 0, %s71
      %s86 = sphi 0, %s72
      %s90 = sphi 0, %s90
      %s92 = sphi 0, %s90
      %s93 = sphi 0, %s92
      %s107 = sphi 0, %s93
      %s111 = sphi 0, %s111
      %s113 = sphi 0, %s111
      %s114 = sphi 0, %s113
      %s128 = sphi 0, %s114
      %s134 = sphi 0, %s136
      %s137 = sphi 0, %s134
      %s138 = sphi 0, %s137
      %s154 = sphi 0, %s138
    $region4: #{tpu_custom_call.1} parent=1 // loop_header_branch
      %17 = sbr.rel (%p15) target = $region8
    $region5: #{tpu_custom_call.1} parent=1 // loop_body
      %s19 = ssub.s32 %s14, 1
      %s20 = ssub.s32 %s14, 2
      %s21 = sadd.s32 %s14, 1
      %s22 = ssub.s32 %s14, %s21
      %p23 = scmp.eq.s32.totalorder %s22, 0
      %s25 = sadd.s32 %s24, 1
      %s26 = scalar_select %p23, %s24, %s25
      %p29 = pneg %p23
      %p30 = scmp.eq.s32.totalorder %s14, 1
      %p31 = por %p29, %p30
      %p32 = scmp.ne.s32.totalorder %s24, %s27
      %p33 = scmp.eq.s32.totalorder %s14, 0
      %p34 = por %p32, %p33
      %p35 = scmp.ne.s32.totalorder %s24, %s27
      %p36 = scmp.eq.s32.totalorder %s19, 1
      %p37 = por %p35, %p36
      %p38 = scmp.ne.s32.totalorder %s27, %s28
      %p39 = scmp.eq.s32.totalorder %s19, 0
      %p40 = por %p38, %p39
      %p41 = scmp.ne.s32.totalorder %s27, %s28
      %p42 = scmp.eq.s32.totalorder %s20, 1
      %p43 = por %p41, %p42
      %p45 = scmp.ne.s32.totalorder %s28, %s44
      %p46 = scmp.eq.s32.totalorder %s20, 0
      %p47 = por %p45, %p46
      %s49 = sadd.s32 %s48, 1
      %p52 = scmp.eq.s32.totalorder %s14, 1
      %p53 = scmp.ne.s32.totalorder %s48, %s50
      %p54 = scmp.eq.s32.totalorder %s14, 0
      %p55 = por %p53, %p54
      %p56 = scmp.ne.s32.totalorder %s48, %s50
      %p57 = scmp.eq.s32.totalorder %s19, 1
      %p58 = por %p56, %p57
      %p59 = scmp.ne.s32.totalorder %s50, %s51
      %p60 = scmp.eq.s32.totalorder %s19, 0
      %p61 = por %p59, %p60
      %p62 = scmp.ne.s32.totalorder %s50, %s51
      %p63 = scmp.eq.s32.totalorder %s20, 1
      %p64 = por %p62, %p63
      %p66 = scmp.ne.s32.totalorder %s51, %s65
      %p67 = scmp.eq.s32.totalorder %s20, 0
      %p68 = por %p66, %p67
      %s70 = sadd.s32 %s69, 1
      %p73 = scmp.eq.s32.totalorder %s14, 1
      %p74 = scmp.ne.s32.totalorder %s69, %s71
      %p75 = scmp.eq.s32.totalorder %s14, 0
      %p76 = por %p74, %p75
      %p77 = scmp.ne.s32.totalorder %s69, %s71
      %p78 = scmp.eq.s32.totalorder %s19, 1
      %p79 = por %p77, %p78
      %p80 = scmp.ne.s32.totalorder %s71, %s72
      %p81 = scmp.eq.s32.totalorder %s19, 0
      %p82 = por %p80, %p81
      %p83 = scmp.ne.s32.totalorder %s71, %s72
      %p84 = scmp.eq.s32.totalorder %s20, 1
      %p85 = por %p83, %p84
      %p87 = scmp.ne.s32.totalorder %s72, %s86
      %p88 = scmp.eq.s32.totalorder %s20, 0
      %p89 = por %p87, %p88
      %s91 = sadd.s32 %s90, 1
      %p94 = scmp.eq.s32.totalorder %s14, 1
      %p95 = scmp.ne.s32.totalorder %s90, %s92
      %p96 = scmp.eq.s32.totalorder %s14, 0
      %p97 = por %p95, %p96
      %p98 = scmp.ne.s32.totalorder %s90, %s92
      %p99 = scmp.eq.s32.totalorder %s19, 1
      %p100 = por %p98, %p99
      %p101 = scmp.ne.s32.totalorder %s92, %s93
      %p102 = scmp.eq.s32.totalorder %s19, 0
      %p103 = por %p101, %p102
      %p104 = scmp.ne.s32.totalorder %s92, %s93
      %p105 = scmp.eq.s32.totalorder %s20, 1
      %p106 = por %p104, %p105
      %p108 = scmp.ne.s32.totalorder %s93, %s107
      %p109 = scmp.eq.s32.totalorder %s20, 0
      %p110 = por %p108, %p109
      %s112 = sadd.s32 %s111, 1
      %p115 = scmp.eq.s32.totalorder %s14, 1
      %p116 = scmp.ne.s32.totalorder %s111, %s113
      %p117 = scmp.eq.s32.totalorder %s14, 0
      %p118 = por %p116, %p117
      %p119 = scmp.ne.s32.totalorder %s111, %s113
      %p120 = scmp.eq.s32.totalorder %s19, 1
      %p121 = por %p119, %p120
      %p122 = scmp.ne.s32.totalorder %s113, %s114
      %p123 = scmp.eq.s32.totalorder %s19, 0
      %p124 = por %p122, %p123
      %p125 = scmp.ne.s32.totalorder %s113, %s114
      %p126 = scmp.eq.s32.totalorder %s20, 1
      %p127 = por %p125, %p126
      %p129 = scmp.ne.s32.totalorder %s114, %s128
      %p130 = scmp.eq.s32.totalorder %s20, 0
      %p131 = por %p129, %p130
      %s132 = ssub.s32 %s14, %s21
      %p133 = scmp.eq.s32.totalorder %s132, 0
      %s135 = sadd.s32 %s134, 1
      %s136 = scalar_select %p133, %s134, %s135
      %p139 = pneg %p133
      %p140 = scmp.eq.s32.totalorder %s14, 1
      %p141 = por %p139, %p140
      %p142 = scmp.ne.s32.totalorder %s134, %s137
      %p143 = scmp.eq.s32.totalorder %s14, 0
      %p144 = por %p142, %p143
      %p145 = scmp.ne.s32.totalorder %s134, %s137
      %p146 = scmp.eq.s32.totalorder %s19, 1
      %p147 = por %p145, %p146
      %p148 = scmp.ne.s32.totalorder %s137, %s138
      %p149 = scmp.eq.s32.totalorder %s19, 0
      %p150 = por %p148, %p149
      %p151 = scmp.ne.s32.totalorder %s137, %s138
      %p152 = scmp.eq.s32.totalorder %s20, 1
      %p153 = por %p151, %p152
      %p155 = scmp.ne.s32.totalorder %s138, %s154
      %p156 = scmp.eq.s32.totalorder %s20, 0
      %p157 = por %p155, %p156
      %p158 = scmp.le.s32.totalorder 1, %s14
      %p159 = scmp.lt.s32.totalorder %s14, 3
      %p160 = pnand %p158, %p159
      %p161 = pneg %p160
      // Predicated region
      $region9: #{tpu_custom_call.1} parent=5 // pred_check
        _
      $region10: #{tpu_custom_call.1} parent=5 // pred_check_branch
        %163 = sbr.rel (%p160) target = $region12
      $region11: #{tpu_custom_call.1} parent=5 // pred_region
        %s164 = ssub.s32 %s14, 1
        // Predicated region
        $region13: #{tpu_custom_call.1} parent=11 // pred_check
          %p165 = pneg %p61
        $region14: #{tpu_custom_call.1} parent=11 // pred_check_branch
          %167 = sbr.rel (%p165) target = $region16
        $region15: #{tpu_custom_call.1} parent=11 // pred_region
          _
        $region16: #{tpu_custom_call.1} parent=11 // pred_fallthru
          _
        // Predicated region
        $region17: #{tpu_custom_call.1} parent=11 // pred_check
          %p168 = pneg %p82
        $region18: #{tpu_custom_call.1} parent=11 // pred_check_branch
          %170 = sbr.rel (%p168) target = $region20
        $region19: #{tpu_custom_call.1} parent=11 // pred_region
          _
        $region20: #{tpu_custom_call.1} parent=11 // pred_fallthru
          _
        // Predicated region
        $region21: #{tpu_custom_call.1} parent=11 // pred_check
          %p171 = pneg %p103
        $region22: #{tpu_custom_call.1} parent=11 // pred_check_branch
          %173 = sbr.rel (%p171) target = $region24
        $region23: #{tpu_custom_call.1} parent=11 // pred_region
          _
        $region24: #{tpu_custom_call.1} parent=11 // pred_fallthru
          _
        // Predicated region
        $region25: #{tpu_custom_call.1} parent=11 // pred_check
          %p174 = pneg %p124
        $region26: #{tpu_custom_call.1} parent=11 // pred_check_branch
          %176 = sbr.rel (%p174) target = $region28
        $region27: #{tpu_custom_call.1} parent=11 // pred_region
          _
        $region28: #{tpu_custom_call.1} parent=11 // pred_fallthru
          _
      $region12: #{tpu_custom_call.1} parent=5 // pred_fallthru
        _
      %p177 = scmp.lt.s32.totalorder %s14, 2
      // Predicated region
      $region29: #{tpu_custom_call.1} parent=5 // pred_check
        %p178 = pneg %p177
      $region30: #{tpu_custom_call.1} parent=5 // pred_check_branch
        %180 = sbr.rel (%p178) target = $region32
      $region31: #{tpu_custom_call.1} parent=5 // pred_region
        // Predicated region
        $region33: #{tpu_custom_call.1} parent=31 // pred_check
          %p181 = pneg %p34
        $region34: #{tpu_custom_call.1} parent=31 // pred_check_branch
          %183 = sbr.rel (%p181) target = $region36
        $region35: #{tpu_custom_call.1} parent=31 // pred_region
          %s184 = smul.u32 16, %s14
          %p185 = scmp.lt.s32.totalorder %s184, 31
          %s186 = scalar_select %p185, %s184, 31
          %s187 = smul.addr %s186, 8
          %s188 = scalar_lea.vmem %s0, %s187
          %s189 = smul.u32 16, %s14
        $region36: #{tpu_custom_call.1} parent=31 // pred_fallthru
          _
      $region32: #{tpu_custom_call.1} parent=5 // pred_fallthru
        _
      %p190 = scmp.le.s32.totalorder 1, %s14
      %p191 = scmp.lt.s32.totalorder %s14, 3
      %p192 = pnand %p190, %p191
      %p193 = pneg %p192
      // Predicated region
      $region37: #{tpu_custom_call.1} parent=5 // pred_check
        _
      $region38: #{tpu_custom_call.1} parent=5 // pred_check_branch
        %195 = sbr.rel (%p192) target = $region40
      $region39: #{tpu_custom_call.1} parent=5 // pred_region
        %s196 = ssub.s32 %s14, 1
        %s197 = smul.u32 16, %s19
        %p198 = scmp.lt.s32.totalorder %s197, 31
        %s199 = scalar_select %p198, %s197, 31
        %s200 = smul.addr %s199, 8
        %s201 = scalar_lea.vmem %s0, %s200
        %p202 = pneg %p40
        %p203 = pneg %p37
        %p204 = pneg %p61
        %p205 = pneg %p58
        %p206 = pneg %p82
        %p207 = pneg %p79
        %p208 = pneg %p103
        %p209 = pneg %p100
        %p210 = pneg %p124
        %p211 = pneg %p121
        %p212 = pneg %p150
        %p213 = pneg %p147
        %s214 = sand.u32 %s137, 1
        %s215 = scalar_lea.sflag [#allocation3], %s214
        %s216 = sand.u32 %s137, 1
        %s217 = smul.addr %s216, 128
        %s218 = scalar_lea.vmem [#allocation2], %s217
        %s219 = smul.u32 16, %s19
        %p220 = scmp.lt.s32.totalorder %s219, 31
        %s221 = scalar_select %p220, %s219, 31
        %s222 = smul.addr %s221, 8
        %s223 = scalar_lea.vmem %s0, %s222
        %s224 = smul.u32 16, %s19
        %s225 = smul.u32 16, %s19
        %v226 = vld [vmem:[%s223] sm:$0xff]
        %v227 = vld [vmem:[%s223 + $0x8] sm:$0xff]
        %v228 = vld [vmem:[%s223 + $0x10] sm:$0xff]
        %v229 = vld [vmem:[%s223 + $0x18] sm:$0xff]
        %v230 = vld [vmem:[%s223 + $0x20] sm:$0xff]
        %v231 = vld [vmem:[%s223 + $0x28] sm:$0xff]
        %v232 = vld [vmem:[%s223 + $0x30] sm:$0xff]
        %v233 = vld [vmem:[%s223 + $0x38] sm:$0xff]
        %v234 = vld [vmem:[%s223 + $0x40] sm:$0xff]
        %v235 = vld [vmem:[%s223 + $0x48] sm:$0xff]
        %v236 = vld [vmem:[%s223 + $0x50] sm:$0xff]
        %v237 = vld [vmem:[%s223 + $0x58] sm:$0xff]
        %v238 = vld [vmem:[%s223 + $0x60] sm:$0xff]
        %v239 = vld [vmem:[%s223 + $0x68] sm:$0xff]
        %v240 = vld [vmem:[%s223 + $0x70] sm:$0xff]
        %v241 = vld [vmem:[%s223 + $0x78] sm:$0xff]
        %v242 = vld [vmem:[%s1] sm:$0xff]
        %v243 = vld [vmem:[%s1 + $0x8] sm:$0xff]
        %v244 = vld [vmem:[%s1 + $0x10] sm:$0xff]
        %v245 = vld [vmem:[%s1 + $0x18] sm:$0xff]
        %v246 = vld [vmem:[%s2] sm:$0x1]
        %v248 = vlaneseq
        %v249 = vshrl.u32 %v248, 7
        %v250 = vsub.s32 0, %v249
        %v251 = vrot.slane %v246, %v250
        %vm253 = vcmask 261120
        %v255 = vsel %vm253, %v226, 0
        %v258 = vsel %vm253, %v227, 0
        %v261 = vsel %vm253, %v228, 0
        %v264 = vsel %vm253, %v229, 0
        %v267 = vsel %vm253, %v230, 0
        %v270 = vsel %vm253, %v231, 0
        %v273 = vsel %vm253, %v232, 0
        %v276 = vsel %vm253, %v233, 0
        %v279 = vsel %vm253, %v234, 0
        %v282 = vsel %vm253, %v235, 0
        %v285 = vsel %vm253, %v236, 0
        %v288 = vsel %vm253, %v237, 0
        %v291 = vsel %vm253, %v238, 0
        %v294 = vsel %vm253, %v239, 0
        %v297 = vsel %vm253, %v240, 0
        %v300 = vsel %vm253, %v241, 0
        %302 = vmatprep.subr.mxu0 0.0
        %303 = vmatpush1.msra.mxu0 0.0
        %304 = vmatprep.subr.mxu0 0.0
        %305 = vmatpush1.msra.mxu0 0.0
        %306 = vmatprep.subr.mxu0 0.0
        %307 = vmatpush1.msra.mxu0 0.0
        %308 = vmatprep.subr.mxu0 0.0
        %309 = vmatpush1.msra.mxu0 0.0
        %310 = vmatprep.subr.mxu0 0.0
        %311 = vmatpush1.msra.mxu0 0.0
        %312 = vmatprep.subr.mxu0 0.0
        %313 = vmatpush1.msra.mxu0 0.0
        %314 = vmatprep.subr.mxu0 0.0
        %315 = vmatpush1.msra.mxu0 0.0
        %316 = vmatprep.subr.mxu0 0.0
        %317 = vmatpush1.msra.mxu0 0.0
        %318 = vmatprep.subr.mxu0 0.0
        %319 = vmatpush1.msra.mxu0 0.0
        %320 = vmatprep.subr.mxu0 0.0
        %321 = vmatpush1.msra.mxu0 0.0
        %322 = vmatprep.subr.mxu0 0.0
        %323 = vmatpush1.msra.mxu0 0.0
        %324 = vmatprep.subr.mxu0 0.0
        %325 = vmatpush1.msra.mxu0 0.0
        %326 = vmatprep.subr.mxu0 0.0
        %327 = vmatpush1.msra.mxu0 %v245
        %328 = vmatprep.subr.mxu0 0.0
        %329 = vmatpush1.msra.mxu0 %v244
        %330 = vmatprep.subr.mxu0 0.0
        %331 = vmatpush1.msra.mxu0 %v243
        %332 = vmatprep.subr.mxu0 0.0
        %333 = vmatpush1.msra.mxu0 %v242
        %334 = vmatprep.subr.mxu0 0.0
        %335 = vmatpush2.msra.mxu0 0.0
        %336 = vmatprep.subr.mxu0 0.0
        %337 = vmatpush2.msra.mxu0 0.0
        %338 = vmatprep.subr.mxu0 0.0
        %339 = vmatpush2.msra.mxu0 0.0
        %340 = vmatprep.subr.mxu0 0.0
        %341 = vmatpush2.msra.mxu0 0.0
        %342 = vmatprep.subr.mxu0 0.0
        %343 = vmatpush2.msra.mxu0 0.0
        %344 = vmatprep.subr.mxu0 0.0
        %345 = vmatpush2.msra.mxu0 0.0
        %346 = vmatprep.subr.mxu0 0.0
        %347 = vmatpush2.msra.mxu0 0.0
        %348 = vmatprep.subr.mxu0 0.0
        %349 = vmatpush2.msra.mxu0 0.0
        %350 = vmatprep.subr.mxu0 0.0
        %351 = vmatpush2.msra.mxu0 0.0
        %352 = vmatprep.subr.mxu0 0.0
        %353 = vmatpush2.msra.mxu0 0.0
        %354 = vmatprep.subr.mxu0 0.0
        %355 = vmatpush2.msra.mxu0 0.0
        %356 = vmatprep.subr.mxu0 0.0
        %357 = vmatpush2.msra.mxu0 0.0
        %358 = vmatprep.subr.mxu0 0.0
        %359 = vmatpush2.msra.mxu0 0.0
        %360 = vmatprep.subr.mxu0 0.0
        %361 = vmatpush2.msra.mxu0 0.0
        %362 = vmatprep.subr.mxu0 0.0
        %363 = vmatpush2.msra.mxu0 0.0
        %364 = vmatprep.subr.mxu0 0.0
        %365 = vmatpush2.msra.mxu0 0.0
        %366 = vmatprep.mubr.f32.mxu0 0.0
        %367 = vmatmul.mubr.f32.gmra.mxu0 %v255
        %v368 = vpop.f32.mrf.mxu0
        %v369 = vadd.f32 %v251, %v368
        %v370 = vpop.f32.mrf.mxu0
        %371 = vmatprep.mubr.f32.mxu0 0.0
        %372 = vmatmul.mubr.f32.gmra.mxu0 %v258
        %v373 = vpop.f32.mrf.mxu0
        %v374 = vadd.f32 %v251, %v373
        %v375 = vpop.f32.mrf.mxu0
        %376 = vmatprep.mubr.f32.mxu0 0.0
        %377 = vmatmul.mubr.f32.gmra.mxu0 %v261
        %v378 = vpop.f32.mrf.mxu0
        %v379 = vadd.f32 %v251, %v378
        %v380 = vpop.f32.mrf.mxu0
        %381 = vmatprep.mubr.f32.mxu0 0.0
        %382 = vmatmul.mubr.f32.gmra.mxu0 %v264
        %v383 = vpop.f32.mrf.mxu0
        %v384 = vadd.f32 %v251, %v383
        %v385 = vpop.f32.mrf.mxu0
        %386 = vmatprep.mubr.f32.mxu0 0.0
        %387 = vmatmul.mubr.f32.gmra.mxu0 %v267
        %v388 = vpop.f32.mrf.mxu0
        %v389 = vadd.f32 %v251, %v388
        %v390 = vpop.f32.mrf.mxu0
        %391 = vmatprep.mubr.f32.mxu0 0.0
        %392 = vmatmul.mubr.f32.gmra.mxu0 %v270
        %v393 = vpop.f32.mrf.mxu0
        %v394 = vadd.f32 %v251, %v393
        %v395 = vpop.f32.mrf.mxu0
        %396 = vmatprep.mubr.f32.mxu0 0.0
        %397 = vmatmul.mubr.f32.gmra.mxu0 %v273
        %v398 = vpop.f32.mrf.mxu0
        %v399 = vadd.f32 %v251, %v398
        %v400 = vpop.f32.mrf.mxu0
        %401 = vmatprep.mubr.f32.mxu0 0.0
        %402 = vmatmul.mubr.f32.gmra.mxu0 %v276
        %v403 = vpop.f32.mrf.mxu0
        %v404 = vadd.f32 %v251, %v403
        %v405 = vpop.f32.mrf.mxu0
        %406 = vmatprep.mubr.f32.mxu0 0.0
        %407 = vmatmul.mubr.f32.gmra.mxu0 %v279
        %v408 = vpop.f32.mrf.mxu0
        %v409 = vadd.f32 %v251, %v408
        %v410 = vpop.f32.mrf.mxu0
        %411 = vmatprep.mubr.f32.mxu0 0.0
        %412 = vmatmul.mubr.f32.gmra.mxu0 %v282
        %v413 = vpop.f32.mrf.mxu0
        %v414 = vadd.f32 %v251, %v413
        %v415 = vpop.f32.mrf.mxu0
        %416 = vmatprep.mubr.f32.mxu0 0.0
        %417 = vmatmul.mubr.f32.gmra.mxu0 %v285
        %v418 = vpop.f32.mrf.mxu0
        %v419 = vadd.f32 %v251, %v418
        %v420 = vpop.f32.mrf.mxu0
        %421 = vmatprep.mubr.f32.mxu0 0.0
        %422 = vmatmul.mubr.f32.gmra.mxu0 %v288
        %v423 = vpop.f32.mrf.mxu0
        %v424 = vadd.f32 %v251, %v423
        %v425 = vpop.f32.mrf.mxu0
        %426 = vmatprep.mubr.f32.mxu0 0.0
        %427 = vmatmul.mubr.f32.gmra.mxu0 %v291
        %v428 = vpop.f32.mrf.mxu0
        %v429 = vadd.f32 %v251, %v428
        %v430 = vpop.f32.mrf.mxu0
        %431 = vmatprep.mubr.f32.mxu0 0.0
        %432 = vmatmul.mubr.f32.gmra.mxu0 %v294
        %v433 = vpop.f32.mrf.mxu0
        %v434 = vadd.f32 %v251, %v433
        %v435 = vpop.f32.mrf.mxu0
        %436 = vmatprep.mubr.f32.mxu0 0.0
        %437 = vmatmul.mubr.f32.gmra.mxu0 %v297
        %v438 = vpop.f32.mrf.mxu0
        %v439 = vadd.f32 %v251, %v438
        %v440 = vpop.f32.mrf.mxu0
        %441 = vmatprep.mubr.f32.mxu0 0.0
        %442 = vmatmul.mubr.f32.gmra.mxu0 %v300
        %v443 = vpop.f32.mrf.mxu0
        %v444 = vadd.f32 %v251, %v443
        %v445 = vpop.f32.mrf.mxu0
        %446 = vdwg.mxu0
        %v447 = vmul.f32 %v369, 0.5
        %v448 = vmul.f32 %v374, 0.5
        %v449 = vmul.f32 %v379, 0.5
        %v450 = vmul.f32 %v384, 0.5
        %v451 = vmul.f32 %v389, 0.5
        %v452 = vmul.f32 %v394, 0.5
        %v453 = vmul.f32 %v399, 0.5
        %v454 = vmul.f32 %v404, 0.5
        %v455 = vmul.f32 %v409, 0.5
        %v456 = vmul.f32 %v414, 0.5
        %v457 = vmul.f32 %v419, 0.5
        %v458 = vmul.f32 %v424, 0.5
        %v459 = vmul.f32 %v429, 0.5
        %v460 = vmul.f32 %v434, 0.5
        %v461 = vmul.f32 %v439, 0.5
        %v462 = vmul.f32 %v444, 0.5
        %v463 = vmul.f32 %v369, 0.70710677
        %v464 = vmul.f32 %v374, 0.70710677
        %v465 = vmul.f32 %v379, 0.70710677
        %v466 = vmul.f32 %v384, 0.70710677
        %v467 = vmul.f32 %v389, 0.70710677
        %v468 = vmul.f32 %v394, 0.70710677
        %v469 = vmul.f32 %v399, 0.70710677
        %v470 = vmul.f32 %v404, 0.70710677
        %v471 = vmul.f32 %v409, 0.70710677
        %v472 = vmul.f32 %v414, 0.70710677
        %v473 = vmul.f32 %v419, 0.70710677
        %v474 = vmul.f32 %v424, 0.70710677
        %v475 = vmul.f32 %v429, 0.70710677
        %v476 = vmul.f32 %v434, 0.70710677
        %v477 = vmul.f32 %v439, 0.70710677
        %v478 = vmul.f32 %v444, 0.70710677
        %v479 = verf.f32.pop %v463
        %v480 = verf.f32.pop %v464
        %v481 = verf.f32.pop %v465
        %v482 = verf.f32.pop %v466
        %v483 = verf.f32.pop %v467
        %v484 = verf.f32.pop %v468
        %v485 = verf.f32.pop %v469
        %v486 = verf.f32.pop %v470
        %v487 = verf.f32.pop %v471
        %v488 = verf.f32.pop %v472
        %v489 = verf.f32.pop %v473
        %v490 = verf.f32.pop %v474
        %v491 = verf.f32.pop %v475
        %v492 = verf.f32.pop %v476
        %v493 = verf.f32.pop %v477
        %v494 = verf.f32.pop %v478
        %v495 = vadd.f32 %v479, 1.0
        %v496 = vadd.f32 %v480, 1.0
        %v497 = vadd.f32 %v481, 1.0
        %v498 = vadd.f32 %v482, 1.0
        %v499 = vadd.f32 %v483, 1.0
        %v500 = vadd.f32 %v484, 1.0
        %v501 = vadd.f32 %v485, 1.0
        %v502 = vadd.f32 %v486, 1.0
        %v503 = vadd.f32 %v487, 1.0
        %v504 = vadd.f32 %v488, 1.0
        %v505 = vadd.f32 %v489, 1.0
        %v506 = vadd.f32 %v490, 1.0
        %v507 = vadd.f32 %v491, 1.0
        %v508 = vadd.f32 %v492, 1.0
        %v509 = vadd.f32 %v493, 1.0
        %v510 = vadd.f32 %v494, 1.0
        %v511 = vmul.f32 %v447, %v495
        %v512 = vmul.f32 %v448, %v496
        %v513 = vmul.f32 %v449, %v497
        %v514 = vmul.f32 %v450, %v498
        %v515 = vmul.f32 %v451, %v499
        %v516 = vmul.f32 %v452, %v500
        %v517 = vmul.f32 %v453, %v501
        %v518 = vmul.f32 %v454, %v502
        %v519 = vmul.f32 %v455, %v503
        %v520 = vmul.f32 %v456, %v504
        %v521 = vmul.f32 %v457, %v505
        %v522 = vmul.f32 %v458, %v506
        %v523 = vmul.f32 %v459, %v507
        %v524 = vmul.f32 %v460, %v508
        %v525 = vmul.f32 %v461, %v509
        %v526 = vmul.f32 %v462, %v510
        %v527 = vld [vmem:[%s3] sm:$0xff]
        %v528 = vld [vmem:[%s3 + $0x8] sm:$0xff]
        %v529 = vld [vmem:[%s3 + $0x10] sm:$0xff]
        %v530 = vld [vmem:[%s3 + $0x18] sm:$0xff]
        %v531 = vld [vmem:[%s3 + $0x20] sm:$0xff]
        %v532 = vld [vmem:[%s3 + $0x28] sm:$0xff]
        %v533 = vld [vmem:[%s3 + $0x30] sm:$0xff]
        %v534 = vld [vmem:[%s3 + $0x38] sm:$0xff]
        %v535 = vld [vmem:[%s4] sm:$0x1]
        %v537 = vlaneseq
        %v538 = vshrl.u32 %v537, 7
        %v539 = vsub.s32 0, %v538
        %v540 = vrot.slane %v535, %v539
        %vm542 = vcmask 523264
        %v544 = vsel %vm542, %v511, 0
        %v547 = vsel %vm542, %v512, 0
        %v550 = vsel %vm542, %v513, 0
        %v553 = vsel %vm542, %v514, 0
        %v556 = vsel %vm542, %v515, 0
        %v559 = vsel %vm542, %v516, 0
        %v562 = vsel %vm542, %v517, 0
        %v565 = vsel %vm542, %v518, 0
        %v568 = vsel %vm542, %v519, 0
        %v571 = vsel %vm542, %v520, 0
        %v574 = vsel %vm542, %v521, 0
        %v577 = vsel %vm542, %v522, 0
        %v580 = vsel %vm542, %v523, 0
        %v583 = vsel %vm542, %v524, 0
        %v586 = vsel %vm542, %v525, 0
        %v589 = vsel %vm542, %v526, 0
        %591 = vmatprep.subr.mxu0 0.0
        %592 = vmatpush1.msra.mxu0 0.0
        %593 = vmatprep.subr.mxu0 0.0
        %594 = vmatpush1.msra.mxu0 0.0
        %595 = vmatprep.subr.mxu0 0.0
        %596 = vmatpush1.msra.mxu0 0.0
        %597 = vmatprep.subr.mxu0 0.0
        %598 = vmatpush1.msra.mxu0 0.0
        %599 = vmatprep.subr.mxu0 0.0
        %600 = vmatpush1.msra.mxu0 0.0
        %601 = vmatprep.subr.mxu0 0.0
        %602 = vmatpush1.msra.mxu0 0.0
        %603 = vmatprep.subr.mxu0 0.0
        %604 = vmatpush1.msra.mxu0 0.0
        %605 = vmatprep.subr.mxu0 0.0
        %606 = vmatpush1.msra.mxu0 0.0
        %607 = vmatprep.subr.mxu0 0.0
        %608 = vmatpush1.msra.mxu0 %v534
        %609 = vmatprep.subr.mxu0 0.0
        %610 = vmatpush1.msra.mxu0 %v533
        %611 = vmatprep.subr.mxu0 0.0
        %612 = vmatpush1.msra.mxu0 %v532
        %613 = vmatprep.subr.mxu0 0.0
        %614 = vmatpush1.msra.mxu0 %v531
        %615 = vmatprep.subr.mxu0 0.0
        %616 = vmatpush1.msra.mxu0 %v530
        %617 = vmatprep.subr.mxu0 0.0
        %618 = vmatpush1.msra.mxu0 %v529
        %619 = vmatprep.subr.mxu0 0.0
        %620 = vmatpush1.msra.mxu0 %v528
        %621 = vmatprep.subr.mxu0 0.0
        %622 = vmatpush1.msra.mxu0 %v527
        %623 = vmatprep.subr.mxu0 0.0
        %624 = vmatpush2.msra.mxu0 0.0
        %625 = vmatprep.subr.mxu0 0.0
        %626 = vmatpush2.msra.mxu0 0.0
        %627 = vmatprep.subr.mxu0 0.0
        %628 = vmatpush2.msra.mxu0 0.0
        %629 = vmatprep.subr.mxu0 0.0
        %630 = vmatpush2.msra.mxu0 0.0
        %631 = vmatprep.subr.mxu0 0.0
        %632 = vmatpush2.msra.mxu0 0.0
        %633 = vmatprep.subr.mxu0 0.0
        %634 = vmatpush2.msra.mxu0 0.0
        %635 = vmatprep.subr.mxu0 0.0
        %636 = vmatpush2.msra.mxu0 0.0
        %637 = vmatprep.subr.mxu0 0.0
        %638 = vmatpush2.msra.mxu0 0.0
        %639 = vmatprep.subr.mxu0 0.0
        %640 = vmatpush2.msra.mxu0 0.0
        %641 = vmatprep.subr.mxu0 0.0
        %642 = vmatpush2.msra.mxu0 0.0
        %643 = vmatprep.subr.mxu0 0.0
        %644 = vmatpush2.msra.mxu0 0.0
        %645 = vmatprep.subr.mxu0 0.0
        %646 = vmatpush2.msra.mxu0 0.0
        %647 = vmatprep.subr.mxu0 0.0
        %648 = vmatpush2.msra.mxu0 0.0
        %649 = vmatprep.subr.mxu0 0.0
        %650 = vmatpush2.msra.mxu0 0.0
        %651 = vmatprep.subr.mxu0 0.0
        %652 = vmatpush2.msra.mxu0 0.0
        %653 = vmatprep.subr.mxu0 0.0
        %654 = vmatpush2.msra.mxu0 0.0
        %655 = vmatprep.mubr.f32.mxu0 0.0
        %656 = vmatmul.mubr.f32.gmra.mxu0 %v544
        %v657 = vpop.f32.mrf.mxu0
        %v658 = vadd.f32 %v540, %v657
        %v659 = vpop.f32.mrf.mxu0
        %660 = vmatprep.mubr.f32.mxu0 0.0
        %661 = vmatmul.mubr.f32.gmra.mxu0 %v547
        %v662 = vpop.f32.mrf.mxu0
        %v663 = vadd.f32 %v540, %v662
        %v664 = vpop.f32.mrf.mxu0
        %665 = vmatprep.mubr.f32.mxu0 0.0
        %666 = vmatmul.mubr.f32.gmra.mxu0 %v550
        %v667 = vpop.f32.mrf.mxu0
        %v668 = vadd.f32 %v540, %v667
        %v669 = vpop.f32.mrf.mxu0
        %670 = vmatprep.mubr.f32.mxu0 0.0
        %671 = vmatmul.mubr.f32.gmra.mxu0 %v553
        %v672 = vpop.f32.mrf.mxu0
        %v673 = vadd.f32 %v540, %v672
        %v674 = vpop.f32.mrf.mxu0
        %675 = vmatprep.mubr.f32.mxu0 0.0
        %676 = vmatmul.mubr.f32.gmra.mxu0 %v556
        %v677 = vpop.f32.mrf.mxu0
        %v678 = vadd.f32 %v540, %v677
        %v679 = vpop.f32.mrf.mxu0
        %680 = vmatprep.mubr.f32.mxu0 0.0
        %681 = vmatmul.mubr.f32.gmra.mxu0 %v559
        %v682 = vpop.f32.mrf.mxu0
        %v683 = vadd.f32 %v540, %v682
        %v684 = vpop.f32.mrf.mxu0
        %685 = vmatprep.mubr.f32.mxu0 0.0
        %686 = vmatmul.mubr.f32.gmra.mxu0 %v562
        %v687 = vpop.f32.mrf.mxu0
        %v688 = vadd.f32 %v540, %v687
        %v689 = vpop.f32.mrf.mxu0
        %690 = vmatprep.mubr.f32.mxu0 0.0
        %691 = vmatmul.mubr.f32.gmra.mxu0 %v565
        %v692 = vpop.f32.mrf.mxu0
        %v693 = vadd.f32 %v540, %v692
        %v694 = vpop.f32.mrf.mxu0
        %695 = vmatprep.mubr.f32.mxu0 0.0
        %696 = vmatmul.mubr.f32.gmra.mxu0 %v568
        %v697 = vpop.f32.mrf.mxu0
        %v698 = vadd.f32 %v540, %v697
        %v699 = vpop.f32.mrf.mxu0
        %700 = vmatprep.mubr.f32.mxu0 0.0
        %701 = vmatmul.mubr.f32.gmra.mxu0 %v571
        %v702 = vpop.f32.mrf.mxu0
        %v703 = vadd.f32 %v540, %v702
        %v704 = vpop.f32.mrf.mxu0
        %705 = vmatprep.mubr.f32.mxu0 0.0
        %706 = vmatmul.mubr.f32.gmra.mxu0 %v574
        %v707 = vpop.f32.mrf.mxu0
        %v708 = vadd.f32 %v540, %v707
        %v709 = vpop.f32.mrf.mxu0
        %710 = vmatprep.mubr.f32.mxu0 0.0
        %711 = vmatmul.mubr.f32.gmra.mxu0 %v577
        %v712 = vpop.f32.mrf.mxu0
        %v713 = vadd.f32 %v540, %v712
        %v714 = vpop.f32.mrf.mxu0
        %715 = vmatprep.mubr.f32.mxu0 0.0
        %716 = vmatmul.mubr.f32.gmra.mxu0 %v580
        %v717 = vpop.f32.mrf.mxu0
        %v718 = vadd.f32 %v540, %v717
        %v719 = vpop.f32.mrf.mxu0
        %720 = vmatprep.mubr.f32.mxu0 0.0
        %721 = vmatmul.mubr.f32.gmra.mxu0 %v583
        %v722 = vpop.f32.mrf.mxu0
        %v723 = vadd.f32 %v540, %v722
        %v724 = vpop.f32.mrf.mxu0
        %725 = vmatprep.mubr.f32.mxu0 0.0
        %726 = vmatmul.mubr.f32.gmra.mxu0 %v586
        %v727 = vpop.f32.mrf.mxu0
        %v728 = vadd.f32 %v540, %v727
        %v729 = vpop.f32.mrf.mxu0
        %730 = vmatprep.mubr.f32.mxu0 0.0
        %731 = vmatmul.mubr.f32.gmra.mxu0 %v589
        %v732 = vpop.f32.mrf.mxu0
        %v733 = vadd.f32 %v540, %v732
        %v734 = vpop.f32.mrf.mxu0
        %735 = vdwg.mxu0
        %736 = vst [vmem:[%s218] sm:$0xff] %v658
        %737 = vst [vmem:[%s218 + $0x8] sm:$0xff] %v663
        %738 = vst [vmem:[%s218 + $0x10] sm:$0xff] %v668
        %739 = vst [vmem:[%s218 + $0x18] sm:$0xff] %v673
        %740 = vst [vmem:[%s218 + $0x20] sm:$0xff] %v678
        %741 = vst [vmem:[%s218 + $0x28] sm:$0xff] %v683
        %742 = vst [vmem:[%s218 + $0x30] sm:$0xff] %v688
        %743 = vst [vmem:[%s218 + $0x38] sm:$0xff] %v693
        %744 = vst [vmem:[%s218 + $0x40] sm:$0xff] %v698
        %745 = vst [vmem:[%s218 + $0x48] sm:$0xff] %v703
        %746 = vst [vmem:[%s218 + $0x50] sm:$0xff] %v708
        %747 = vst [vmem:[%s218 + $0x58] sm:$0xff] %v713
        %748 = vst [vmem:[%s218 + $0x60] sm:$0xff] %v718
        %749 = vst [vmem:[%s218 + $0x68] sm:$0xff] %v723
        %750 = vst [vmem:[%s218 + $0x70] sm:$0xff] %v728
        %751 = vst [vmem:[%s218 + $0x78] sm:$0xff] %v733
        %s752 = sand.u32 %s137, 1
        %s753 = scalar_lea.sflag [#allocation3], %s752
        %s754 = sand.u32 %s137, 1
        %s755 = smul.addr %s754, 128
        %s756 = scalar_lea.vmem [#allocation2], %s755
        // Predicated region
        $region41: #{tpu_custom_call.1} parent=39 // pred_check
          %p757 = pneg %p147
        $region42: #{tpu_custom_call.1} parent=39 // pred_check_branch
          %759 = sbr.rel (%p757) target = $region44
        $region43: #{tpu_custom_call.1} parent=39 // pred_region
          %s760 = smul.u32 16, %s19
          %s762 = ssub.s32 2048, 2048
          %763 = vsyncadd %s753, %s762
          %s764 = smul.addr %s760, 128
          %s765 = scalar_lea.hbm %s5, %s764
          %s766 = sshll.u32 %s756, 4
          %s767 = int_to_ptr.vmem [resolvable:$true] %s766
          %772 = dma.vmem_to_hbm [thread:$0]  %s767, 2048, %s765, %s753, 128, 128, 8
        $region44: #{tpu_custom_call.1} parent=39 // pred_fallthru
          _
      $region40: #{tpu_custom_call.1} parent=5 // pred_fallthru
        _
      %p773 = scmp.le.s32.totalorder 2, %s14
      // Predicated region
      $region45: #{tpu_custom_call.1} parent=5 // pred_check
        %p774 = pneg %p773
      $region46: #{tpu_custom_call.1} parent=5 // pred_check_branch
        %776 = sbr.rel (%p774) target = $region48
      $region47: #{tpu_custom_call.1} parent=5 // pred_region
        %s777 = ssub.s32 %s14, 2
        // Predicated region
        $region49: #{tpu_custom_call.1} parent=47 // pred_check
          %p778 = pneg %p153
        $region50: #{tpu_custom_call.1} parent=47 // pred_check_branch
          %780 = sbr.rel (%p778) target = $region52
        $region51: #{tpu_custom_call.1} parent=47 // pred_region
          %s781 = sand.u32 %s138, 1
          %s782 = scalar_lea.sflag [#allocation3], %s781
          %s783 = sand.u32 %s138, 1
          %s784 = smul.addr %s783, 128
          %s785 = scalar_lea.vmem [#allocation2], %s784
          %786 = dma.done %s782, 2048
        $region52: #{tpu_custom_call.1} parent=47 // pred_fallthru
          _
      $region48: #{tpu_custom_call.1} parent=5 // pred_fallthru
        _
    $region6: #{tpu_custom_call.1} parent=1 // loop_footer
      %s18 = sadd.s32 1, %s14
    $region7: #{tpu_custom_call.1} parent=1 // loop_footer_branch
      %13 = sbr.rel target = $region3
    $region8: #{tpu_custom_call.1} parent=1 // loop_exit
      _
    %787 = vsyncpa [#allocation3], 1
    %s788 = scalar_lea.sflag [#allocation3], 1
    %789 = vsyncpa %s788, 1

</llo_original>
